<compile_context>
chip_gen: v7x
topology: tpu7x:2x2x1
jax: 0.10.0
libtpu: 0.0.40
codegen_flags: <defaults>
</compile_context>

<pallas_src>
import functools

import jax
import jax.numpy as jnp
from jax.experimental import pallas as pl
from jax.experimental.pallas import tpu as pltpu


def _residual_linear_kernel(x_ref, w_ref, b_ref, o_ref, *, precision):
    # x_ref: (TM, H) activation tile; w_ref: (H, H) VMEM-resident weight;
    # b_ref: (1, H) bias; o_ref: (TM, H) output tile.
    x = x_ref[...]
    # MXU matmul, f32 accumulate. precision=HIGHEST only for f32 operands.
    acc = jnp.dot(
        x, w_ref[...], preferred_element_type=jnp.float32, precision=precision
    )
    acc = acc + b_ref[...].astype(jnp.float32)
    o_ref[...] = (x.astype(jnp.float32) + acc).astype(o_ref.dtype)


def _round_up(x, m):
    return ((x + m - 1) // m) * m


def _vmem_budget_bytes():
    # Per-generation VMEM capacity (64 MiB on v7x, 128 MiB on v5e/v6e) with
    # headroom for Mosaic internal scratch.
    try:
        cap = pltpu.get_tpu_info().vmem_capacity_bytes
    except Exception:  # fallback if the query is unavailable
        cap = 128 * 1024 * 1024
    return int(cap * 0.85)


@functools.partial(jax.jit, static_argnames=("tm",))
def residual_add(x, w, b, *, tm=None):
    """out = x + (x @ w + b); x: (B, S, H), w: (H_in, H_out), b: (H_out,)."""
    B, S, H = x.shape
    M = B * S
    x_isz = jnp.dtype(x.dtype).itemsize
    w_isz = jnp.dtype(w.dtype).itemsize
    b_isz = jnp.dtype(b.dtype).itemsize

    budget = _vmem_budget_bytes()

    # Sublane packing: 8 rows f32, 16 rows bf16, 32 rows int8/fp8.
    min_tm = 8 * max(1, 4 // x_isz)

    # Target ~2 MiB x/out tiles (amortizes per-grid-step overhead), but keep
    # the four double-buffered I/O tiles well inside the VMEM budget.
    row_bytes = H * x_isz
    target_tile_bytes = min(2 * 1024 * 1024, max(min_tm * row_bytes, budget // 12))
    tm_target = tm if tm is not None else max(min_tm, target_tile_bytes // row_bytes)

    # Balance tiles across M (minimizes pad waste) and use >= 2 tiles whenever
    # possible so both v7x TensorCores get work.
    n_tiles = max(1, pl.cdiv(M, tm_target))
    if M >= 2 * min_tm:
        n_tiles = max(2, n_tiles)
    tm_eff = _round_up(pl.cdiv(M, n_tiles), min_tm)
    m_pad = _round_up(M, tm_eff)
    grid = (m_pad // tm_eff,)

    x2d = x.reshape(M, H)
    if m_pad != M:
        x2d = jnp.pad(x2d, ((0, m_pad - M), (0, 0)))
    b2d = b.reshape(1, H)

    # VMEM estimate: double-buffered x/out tiles + resident W and bias.
    tile_bytes = tm_eff * row_bytes
    vmem_est = 2 * 2 * tile_bytes + 2 * H * H * w_isz + 2 * H * b_isz
    vmem_limit = min(budget, max(32 * 1024 * 1024, int(1.5 * vmem_est) + (2 << 20)))

    cost = pl.CostEstimate(
        flops=2 * m_pad * H * H + 2 * m_pad * H,
        transcendentals=0,
        bytes_accessed=2 * m_pad * H * x_isz + H * H * w_isz + H * b_isz,
    )

    precision = (
        jax.lax.Precision.HIGHEST if jnp.dtype(x.dtype) == jnp.float32 else None
    )
    kernel = functools.partial(_residual_linear_kernel, precision=precision)

    out2d = pl.pallas_call(
        kernel,
        out_shape=jax.ShapeDtypeStruct((m_pad, H), x.dtype),
        grid_spec=pltpu.PrefetchScalarGridSpec(
            num_scalar_prefetch=0,
            grid=grid,
            in_specs=[
                pl.BlockSpec((tm_eff, H), lambda i: (i, 0)),  # x: row tiles, pipelined
                pl.BlockSpec((H, H), lambda i: (0, 0)),       # W: VMEM-resident
                pl.BlockSpec((1, H), lambda i: (0, 0)),       # b: VMEM-resident
            ],
            out_specs=pl.BlockSpec((tm_eff, H), lambda i: (i, 0)),
        ),
        compiler_params=pltpu.CompilerParams(
            dimension_semantics=("parallel",),   # megacore-shard row tiles
            vmem_limit_bytes=int(vmem_limit),
        ),
        cost_estimate=cost,
    )(x2d, w, b2d)

    if m_pad != M:
        out2d = out2d[:M]
    return out2d.reshape(B, S, H)


if __name__ == "__main__":
    key = jax.random.PRNGKey(0)
    k_x, k_w, k_b = jax.random.split(key, 3)

    # Small but lane-dense shapes: hidden is a multiple of 128 so every output
    # store is a full-lane (unmasked) vst.
    batch, seq, hidden = 2, 8, 128
    x = jax.random.normal(k_x, (batch, seq, hidden), dtype=jnp.float32)
    # Deterministic "Linear(hidden, hidden)" parameters stored as (in, out) so
    # the kernel does a plain row-major matmul (== PyTorch x @ W.T with W (out, in)).
    bound = 1.0 / float(hidden) ** 0.5
    w = jax.random.uniform(k_w, (hidden, hidden), jnp.float32, -bound, bound)
    b = jax.random.uniform(k_b, (hidden,), jnp.float32, -bound, bound)

    out = residual_add(x, w, b)
    jax.block_until_ready(out)

    ref = x + (
        jnp.einsum("bsh,ho->bso", x, w, precision=jax.lax.Precision.HIGHEST) + b
    )
    assert out.shape == x.shape
    assert jnp.allclose(out, ref, atol=1e-4, rtol=1e-4), "mismatch vs reference"

    # Exercise the row-padding path (M = 15 rows -> padded up to a sublane multiple).
    x_odd = jax.random.normal(k_x, (3, 5, hidden), dtype=jnp.float32)
    out_odd = residual_add(x_odd, w, b)
    jax.block_until_ready(out_odd)
    ref_odd = x_odd + (
        jnp.einsum("bsh,ho->bso", x_odd, w, precision=jax.lax.Precision.HIGHEST) + b
    )
    assert out_odd.shape == x_odd.shape
    assert jnp.allclose(out_odd, ref_odd, atol=1e-4, rtol=1e-4), "padded-path mismatch"

    print("KERNEL_OK")
</pallas_src>

<mosaic_0001>
module attributes {stable_mosaic.version = 11 : i64} {
  func.func @_residual_linear_kernel(%arg0: i32, %arg1: memref<8x128xf32, #tpu.memory_space<vmem>>, %arg2: memref<128x128xf32, #tpu.memory_space<vmem>>, %arg3: memref<1x128xf32, #tpu.memory_space<vmem>>, %arg4: memref<8x128xf32, #tpu.memory_space<vmem>>) attributes {dimension_semantics = [#tpu.dimension_semantics<parallel>], iteration_bounds = array<i64: 2>, scalar_prefetch = 0 : i64, scratch_operands = 0 : i64, tpu.core_type = #tpu.core_type<tc>, window_params = [{transform_indices = @transform_0, window_bounds = array<i64: 8, 128>}, {pipeline_mode = #tpu.pipeline_mode<synchronous>, transform_indices = @transform_1, window_bounds = array<i64: 128, 128>}, {pipeline_mode = #tpu.pipeline_mode<synchronous>, transform_indices = @transform_2, window_bounds = array<i64: 1, 128>}, {transform_indices = @transform_3, window_bounds = array<i64: 8, 128>}]} {
    %c0 = arith.constant 0 : index
    %c0_0 = arith.constant 0 : index
    %0 = vector.load %arg1[%c0, %c0_0] : memref<8x128xf32, #tpu.memory_space<vmem>>, vector<8x128xf32>
    %c0_1 = arith.constant 0 : index
    %c0_2 = arith.constant 0 : index
    %1 = vector.load %arg2[%c0_1, %c0_2] : memref<128x128xf32, #tpu.memory_space<vmem>>, vector<128x128xf32>
    %cst = arith.constant dense<0.000000e+00> : vector<8x128xf32>
    %2 = tpu.matmul %0, %1, %cst {dimension_numbers = #tpu.dot_dimension_numbers<[1], [0], [0], [1], [0, 0, 1, 1], [], []>, precision = #tpu.contract_precision<fp32>} : vector<8x128xf32>, vector<128x128xf32>, vector<8x128xf32> -> vector<8x128xf32>
    %c0_3 = arith.constant 0 : index
    %c0_4 = arith.constant 0 : index
    %3 = vector.load %arg3[%c0_3, %c0_4] : memref<1x128xf32, #tpu.memory_space<vmem>>, vector<1x128xf32>
    %4 = vector.broadcast %3 : vector<1x128xf32> to vector<8x128xf32>
    %5 = arith.addf %2, %4 : vector<8x128xf32>
    %6 = arith.addf %0, %5 : vector<8x128xf32>
    %c0_5 = arith.constant 0 : index
    %c0_6 = arith.constant 0 : index
    %7 = vector.load %arg4[%c0_5, %c0_6] : memref<8x128xf32, #tpu.memory_space<vmem>>, vector<8x128xf32>
    tpu.vector_store %arg4[%c0_5, %c0_6], %6 {strides = array<i32>} : memref<8x128xf32, #tpu.memory_space<vmem>>, vector<8x128xf32>,
    return
  }
  func.func @transform_0(%arg0: i32) -> (i32, i32) {
    %c0_i32 = arith.constant 0 : i32
    %c0_i32_0 = arith.constant 0 : i32
    return %arg0, %c0_i32 : i32, i32
  }
  func.func @transform_1(%arg0: i32) -> (i32, i32) {
    %c0_i32 = arith.constant 0 : i32
    %c0_i32_0 = arith.constant 0 : i32
    %c0_i32_1 = arith.constant 0 : i32
    return %c0_i32, %c0_i32_0 : i32, i32
  }
  func.func @transform_2(%arg0: i32) -> (i32, i32) {
    %c0_i32 = arith.constant 0 : i32
    %c0_i32_0 = arith.constant 0 : i32
    %c0_i32_1 = arith.constant 0 : i32
    return %c0_i32, %c0_i32_0 : i32, i32
  }
  func.func @transform_3(%arg0: i32) -> (i32, i32) {
    %c0_i32 = arith.constant 0 : i32
    %c0_i32_0 = arith.constant 0 : i32
    return %arg0, %c0_i32 : i32, i32
  }
}

</mosaic_0001>

<llo_original>
// kernel: residual_add.1
$region0: #{residual_add.1}
  #allocation0 [shape = 'u32[]', space=smem, size = 0x4, offset = 0x4, fixed_abs, tag = 'smem constant byte address 0x4 - core index']
  #allocation1 [shape = 'u32[144,128]{1,0:T(1,128)}', space=vmem, size = 0x12000, scoped, tag = 'internal scratch']
  %s0 = inlined_call_operand.hbm [shape: f32[16,128], index: 0, kind: input, shape index: {}]
  %s1 = inlined_call_operand.hbm [shape: f32[128,128], index: 1, kind: input, shape index: {}]
  %s2 = inlined_call_operand.vmem [shape: f32[1,128], index: 2, kind: input, shape index: {}]
  %s3 = inlined_call_operand.hbm [shape: f32[16,128], index: 3, kind: output, shape index: {}]
  %s4 = sld [smem:[#allocation0]]
  $region53: #{residual_add.1} parent=0
    _
  %s6 = ssub.s32 1, %s4
  %s7 = scalar_select 0, %s6, %s4
  $region1: #{residual_add.1} parent=0
    #allocation2 [shape = 'u8[8192]{0}', space=vmem, size = 0x2000, scoped, tag = 'input window, operand 0']
    #allocation3 [shape = 's32[2]{0}', space=sflag, size = 0x8, scoped, tag = 'scoped memory for residual_add.1']
    #allocation4 [shape = 's32[2]{0}', space=sflag, size = 0x8, scoped, tag = 'scoped memory for residual_add.1']
    #allocation5 [shape = 'u8[65536]{0}', space=vmem, size = 0x10000, scoped, tag = 'input window, operand 1, single buffered']
    #allocation6 [shape = 's32[1]{0}', space=sflag, size = 0x4, scoped, tag = 'scoped memory for residual_add.1']
    #allocation7 [shape = 'u8[8192]{0}', space=vmem, size = 0x2000, scoped, tag = 'output window, operand 0']
    %8 = vsyncpa [#allocation3], 0
    %s9 = scalar_lea.sflag [#allocation3], 1
    %10 = vsyncpa %s9, 0
    %11 = vsyncpa [#allocation6], 0
    %12 = vsyncpa [#allocation4], 0
    %s13 = scalar_lea.sflag [#allocation4], 1
    %14 = vsyncpa %s13, 0
    loop: start=0, step=1, limit=4
    $region2: #{residual_add.1} parent=1 // loop_pre_header
      _
    $region3: #{residual_add.1} parent=1 // loop_header
      %s16 = sphi 0, %s20
      %p17 = scmp.ge.s32.totalorder %s16, 4
      %s26 = sphi 0, %s28
      %s29 = sphi 0, %s26
      %s30 = sphi 0, %s29
      %s46 = sphi 0, %s30
      %s50 = sphi 0, %s50
      %s52 = sphi 0, %s50
      %s53 = sphi 0, %s52
      %s67 = sphi 0, %s53
      %s71 = sphi 0, %s71
      %s73 = sphi 0, %s71
      %s74 = sphi 0, %s73
      %s88 = sphi 0, %s74
      %s94 = sphi 0, %s96
      %s97 = sphi 0, %s94
      %s98 = sphi 0, %s97
      %s114 = sphi 0, %s98
    $region4: #{residual_add.1} parent=1 // loop_header_branch
      %19 = sbr.rel (%p17) target = $region8
    $region5: #{residual_add.1} parent=1 // loop_body
      %s21 = ssub.s32 %s16, 1
      %s22 = ssub.s32 %s16, 2
      %s23 = sadd.s32 %s16, 1
      %s24 = ssub.s32 %s16, %s23
      %p25 = scmp.eq.s32.totalorder %s24, 0
      %s27 = sadd.s32 %s26, 1
      %s28 = scalar_select %p25, %s26, %s27
      %p31 = pneg %p25
      %p32 = scmp.eq.s32.totalorder %s16, 1
      %p33 = por %p31, %p32
      %p34 = scmp.ne.s32.totalorder %s26, %s29
      %p35 = scmp.eq.s32.totalorder %s16, 0
      %p36 = por %p34, %p35
      %p37 = scmp.ne.s32.totalorder %s26, %s29
      %p38 = scmp.eq.s32.totalorder %s21, 1
      %p39 = por %p37, %p38
      %p40 = scmp.ne.s32.totalorder %s29, %s30
      %p41 = scmp.eq.s32.totalorder %s21, 0
      %p42 = por %p40, %p41
      %p43 = scmp.ne.s32.totalorder %s29, %s30
      %p44 = scmp.eq.s32.totalorder %s22, 1
      %p45 = por %p43, %p44
      %p47 = scmp.ne.s32.totalorder %s30, %s46
      %p48 = scmp.eq.s32.totalorder %s22, 0
      %p49 = por %p47, %p48
      %s51 = sadd.s32 %s50, 1
      %p54 = scmp.eq.s32.totalorder %s16, 1
      %p55 = scmp.ne.s32.totalorder %s50, %s52
      %p56 = scmp.eq.s32.totalorder %s16, 0
      %p57 = por %p55, %p56
      %p58 = scmp.ne.s32.totalorder %s50, %s52
      %p59 = scmp.eq.s32.totalorder %s21, 1
      %p60 = por %p58, %p59
      %p61 = scmp.ne.s32.totalorder %s52, %s53
      %p62 = scmp.eq.s32.totalorder %s21, 0
      %p63 = por %p61, %p62
      %p64 = scmp.ne.s32.totalorder %s52, %s53
      %p65 = scmp.eq.s32.totalorder %s22, 1
      %p66 = por %p64, %p65
      %p68 = scmp.ne.s32.totalorder %s53, %s67
      %p69 = scmp.eq.s32.totalorder %s22, 0
      %p70 = por %p68, %p69
      %s72 = sadd.s32 %s71, 1
      %p75 = scmp.eq.s32.totalorder %s16, 1
      %p76 = scmp.ne.s32.totalorder %s71, %s73
      %p77 = scmp.eq.s32.totalorder %s16, 0
      %p78 = por %p76, %p77
      %p79 = scmp.ne.s32.totalorder %s71, %s73
      %p80 = scmp.eq.s32.totalorder %s21, 1
      %p81 = por %p79, %p80
      %p82 = scmp.ne.s32.totalorder %s73, %s74
      %p83 = scmp.eq.s32.totalorder %s21, 0
      %p84 = por %p82, %p83
      %p85 = scmp.ne.s32.totalorder %s73, %s74
      %p86 = scmp.eq.s32.totalorder %s22, 1
      %p87 = por %p85, %p86
      %p89 = scmp.ne.s32.totalorder %s74, %s88
      %p90 = scmp.eq.s32.totalorder %s22, 0
      %p91 = por %p89, %p90
      %s92 = ssub.s32 %s16, %s23
      %p93 = scmp.eq.s32.totalorder %s92, 0
      %s95 = sadd.s32 %s94, 1
      %s96 = scalar_select %p93, %s94, %s95
      %p99 = pneg %p93
      %p100 = scmp.eq.s32.totalorder %s16, 1
      %p101 = por %p99, %p100
      %p102 = scmp.ne.s32.totalorder %s94, %s97
      %p103 = scmp.eq.s32.totalorder %s16, 0
      %p104 = por %p102, %p103
      %p105 = scmp.ne.s32.totalorder %s94, %s97
      %p106 = scmp.eq.s32.totalorder %s21, 1
      %p107 = por %p105, %p106
      %p108 = scmp.ne.s32.totalorder %s97, %s98
      %p109 = scmp.eq.s32.totalorder %s21, 0
      %p110 = por %p108, %p109
      %p111 = scmp.ne.s32.totalorder %s97, %s98
      %p112 = scmp.eq.s32.totalorder %s22, 1
      %p113 = por %p111, %p112
      %p115 = scmp.ne.s32.totalorder %s98, %s114
      %p116 = scmp.eq.s32.totalorder %s22, 0
      %p117 = por %p115, %p116
      %p118 = scmp.le.s32.totalorder 1, %s16
      %p119 = scmp.lt.s32.totalorder %s16, 3
      %p120 = pnand %p118, %p119
      %p121 = pneg %p120
      // Predicated region
      $region9: #{residual_add.1} parent=5 // pred_check
        _
      $region10: #{residual_add.1} parent=5 // pred_check_branch
        %123 = sbr.rel (%p120) target = $region12
      $region11: #{residual_add.1} parent=5 // pred_region
        %s124 = ssub.s32 %s16, 1
        // Predicated region
        $region13: #{residual_add.1} parent=11 // pred_check
          %p125 = pneg %p63
        $region14: #{residual_add.1} parent=11 // pred_check_branch
          %127 = sbr.rel (%p125) target = $region16
        $region15: #{residual_add.1} parent=11 // pred_region
          %s129 = ssub.s32 2048, 2048
          %130 = vsyncadd [#allocation6], %s129
          %s131 = sshll.u32 [#allocation5], 4
          %s132 = int_to_ptr.vmem [resolvable:$true] %s131
          %137 = dma.hbm_to_vmem [thread:$0]  %s1, 2048, %s132, [#allocation6], 128, 128, 8
        $region16: #{residual_add.1} parent=11 // pred_fallthru
          _
        // Predicated region
        $region17: #{residual_add.1} parent=11 // pred_check
          %p138 = pneg %p84
        $region18: #{residual_add.1} parent=11 // pred_check_branch
          %140 = sbr.rel (%p138) target = $region20
        $region19: #{residual_add.1} parent=11 // pred_region
          _
        $region20: #{residual_add.1} parent=11 // pred_fallthru
          _
      $region12: #{residual_add.1} parent=5 // pred_fallthru
        _
      %p141 = scmp.lt.s32.totalorder %s16, 2
      // Predicated region
      $region21: #{residual_add.1} parent=5 // pred_check
        %p142 = pneg %p141
      $region22: #{residual_add.1} parent=5 // pred_check_branch
        %144 = sbr.rel (%p142) target = $region24
      $region23: #{residual_add.1} parent=5 // pred_region
        // Predicated region
        $region25: #{residual_add.1} parent=23 // pred_check
          %p145 = pneg %p36
        $region26: #{residual_add.1} parent=23 // pred_check_branch
          %147 = sbr.rel (%p145) target = $region28
        $region27: #{residual_add.1} parent=23 // pred_region
          %s148 = sand.u32 %s26, 1
          %s149 = scalar_lea.sflag [#allocation3], %s148
          %s150 = sand.u32 %s26, 1
          %s151 = smul.addr %s150, 8
          %s152 = scalar_lea.vmem [#allocation2], %s151
          %s154 = ssub.s32 128, 128
          %155 = vsyncadd %s149, %s154
          %s156 = smul.addr %s16, 128
          %s157 = scalar_lea.hbm %s0, %s156
          %s159 = sshll.u32 %s152, 4
          %s160 = int_to_ptr.vmem [resolvable:$true] %s159
          %162 = dma.hbm_to_vmem [thread:$0]  %s157, 128, %s160, %s149
        $region28: #{residual_add.1} parent=23 // pred_fallthru
          _
      $region24: #{residual_add.1} parent=5 // pred_fallthru
        _
      %p163 = scmp.le.s32.totalorder 1, %s16
      %p164 = scmp.lt.s32.totalorder %s16, 3
      %p165 = pnand %p163, %p164
      %p166 = pneg %p165
      // Predicated region
      $region29: #{residual_add.1} parent=5 // pred_check
        _
      $region30: #{residual_add.1} parent=5 // pred_check_branch
        %168 = sbr.rel (%p165) target = $region32
      $region31: #{residual_add.1} parent=5 // pred_region
        %s169 = ssub.s32 %s16, 1
        %s170 = sand.u32 %s29, 1
        %s171 = scalar_lea.sflag [#allocation3], %s170
        %s172 = sand.u32 %s29, 1
        %s173 = smul.addr %s172, 8
        %s174 = scalar_lea.vmem [#allocation2], %s173
        // Predicated region
        $region33: #{residual_add.1} parent=31 // pred_check
          %p175 = pneg %p42
        $region34: #{residual_add.1} parent=31 // pred_check_branch
          %177 = sbr.rel (%p175) target = $region36
        $region35: #{residual_add.1} parent=31 // pred_region
          %178 = dma.done %s171, 128
        $region36: #{residual_add.1} parent=31 // pred_fallthru
          _
        // Predicated region
        $region37: #{residual_add.1} parent=31 // pred_check
          %p179 = pneg %p63
        $region38: #{residual_add.1} parent=31 // pred_check_branch
          %181 = sbr.rel (%p179) target = $region40
        $region39: #{residual_add.1} parent=31 // pred_region
          %182 = dma.done [#allocation6], 2048
        $region40: #{residual_add.1} parent=31 // pred_fallthru
          _
        %s183 = sand.u32 %s29, 1
        %s184 = scalar_lea.sflag [#allocation3], %s183
        %s185 = sand.u32 %s29, 1
        %s186 = smul.addr %s185, 8
        %s187 = scalar_lea.vmem [#allocation2], %s186
        %p188 = pneg %p42
        %p189 = pneg %p39
        %p190 = pneg %p63
        %p191 = pneg %p60
        %p192 = pneg %p84
        %p193 = pneg %p81
        %p194 = pneg %p110
        %p195 = pneg %p107
        %s196 = sand.u32 %s97, 1
        %s197 = scalar_lea.sflag [#allocation4], %s196
        %s198 = sand.u32 %s97, 1
        %s199 = smul.addr %s198, 8
        %s200 = scalar_lea.vmem [#allocation7], %s199
        %v201 = vld [vmem:[%s174] sm:$0xff]
        %v202 = vld [vmem:[#allocation5] sm:$0xff]
        %v203 = vld [vmem:[#allocation5 + $0x8] sm:$0xff]
        %v204 = vld [vmem:[#allocation5 + $0x10] sm:$0xff]
        %v205 = vld [vmem:[#allocation5 + $0x18] sm:$0xff]
        %v206 = vld [vmem:[#allocation5 + $0x20] sm:$0xff]
        %v207 = vld [vmem:[#allocation5 + $0x28] sm:$0xff]
        %v208 = vld [vmem:[#allocation5 + $0x30] sm:$0xff]
        %v209 = vld [vmem:[#allocation5 + $0x38] sm:$0xff]
        %v210 = vld [vmem:[#allocation5 + $0x40] sm:$0xff]
        %v211 = vld [vmem:[#allocation5 + $0x48] sm:$0xff]
        %v212 = vld [vmem:[#allocation5 + $0x50] sm:$0xff]
        %v213 = vld [vmem:[#allocation5 + $0x58] sm:$0xff]
        %v214 = vld [vmem:[#allocation5 + $0x60] sm:$0xff]
        %v215 = vld [vmem:[#allocation5 + $0x68] sm:$0xff]
        %v216 = vld [vmem:[#allocation5 + $0x70] sm:$0xff]
        %v217 = vld [vmem:[#allocation5 + $0x78] sm:$0xff]
        %v218 = vld [vmem:[%s2] sm:$0x1]
        %v220 = vlaneseq
        %v221 = vshrl.u32 %v220, 7
        %v222 = vsub.s32 0, %v221
        %v223 = vrot.slane %v218, %v222
        %225 = vmatprep.subr.mxu0 0.0
        %v226 = vand.u32 %v202, 4294901760
        %227 = vmatpush1.msra.mxu0 %v226
        %228 = vmatprep.subr.mxu0 0.0
        %v229 = vand.u32 %v203, 4294901760
        %230 = vmatpush1.msra.mxu0 %v229
        %231 = vmatprep.subr.mxu0 0.0
        %v232 = vand.u32 %v204, 4294901760
        %233 = vmatpush1.msra.mxu0 %v232
        %234 = vmatprep.subr.mxu0 0.0
        %v235 = vand.u32 %v205, 4294901760
        %236 = vmatpush1.msra.mxu0 %v235
        %237 = vmatprep.subr.mxu0 0.0
        %v238 = vand.u32 %v206, 4294901760
        %239 = vmatpush1.msra.mxu0 %v238
        %240 = vmatprep.subr.mxu0 0.0
        %v241 = vand.u32 %v207, 4294901760
        %242 = vmatpush1.msra.mxu0 %v241
        %243 = vmatprep.subr.mxu0 0.0
        %v244 = vand.u32 %v208, 4294901760
        %245 = vmatpush1.msra.mxu0 %v244
        %246 = vmatprep.subr.mxu0 0.0
        %v247 = vand.u32 %v209, 4294901760
        %248 = vmatpush1.msra.mxu0 %v247
        %249 = vmatprep.subr.mxu0 0.0
        %v250 = vand.u32 %v210, 4294901760
        %251 = vmatpush1.msra.mxu0 %v250
        %252 = vmatprep.subr.mxu0 0.0
        %v253 = vand.u32 %v211, 4294901760
        %254 = vmatpush1.msra.mxu0 %v253
        %255 = vmatprep.subr.mxu0 0.0
        %v256 = vand.u32 %v212, 4294901760
        %257 = vmatpush1.msra.mxu0 %v256
        %258 = vmatprep.subr.mxu0 0.0
        %v259 = vand.u32 %v213, 4294901760
        %260 = vmatpush1.msra.mxu0 %v259
        %261 = vmatprep.subr.mxu0 0.0
        %v262 = vand.u32 %v214, 4294901760
        %263 = vmatpush1.msra.mxu0 %v262
        %264 = vmatprep.subr.mxu0 0.0
        %v265 = vand.u32 %v215, 4294901760
        %266 = vmatpush1.msra.mxu0 %v265
        %267 = vmatprep.subr.mxu0 0.0
        %v268 = vand.u32 %v216, 4294901760
        %269 = vmatpush1.msra.mxu0 %v268
        %270 = vmatprep.subr.mxu0 0.0
        %v271 = vand.u32 %v217, 4294901760
        %272 = vmatpush1.msra.mxu0 %v271
        %273 = vmatprep.subr.mxu0 0.0
        %274 = vmatpush1.msra.mxu0 0.0
        %275 = vmatprep.subr.mxu0 0.0
        %276 = vmatpush1.msra.mxu0 0.0
        %277 = vmatprep.subr.mxu0 0.0
        %278 = vmatpush1.msra.mxu0 0.0
        %279 = vmatprep.subr.mxu0 0.0
        %280 = vmatpush1.msra.mxu0 0.0
        %281 = vmatprep.subr.mxu0 0.0
        %282 = vmatpush1.msra.mxu0 0.0
        %283 = vmatprep.subr.mxu0 0.0
        %284 = vmatpush1.msra.mxu0 0.0
        %285 = vmatprep.subr.mxu0 0.0
        %286 = vmatpush1.msra.mxu0 0.0
        %287 = vmatprep.subr.mxu0 0.0
        %288 = vmatpush1.msra.mxu0 0.0
        %289 = vmatprep.subr.mxu0 0.0
        %290 = vmatpush1.msra.mxu0 0.0
        %291 = vmatprep.subr.mxu0 0.0
        %292 = vmatpush1.msra.mxu0 0.0
        %293 = vmatprep.subr.mxu0 0.0
        %294 = vmatpush1.msra.mxu0 0.0
        %295 = vmatprep.subr.mxu0 0.0
        %296 = vmatpush1.msra.mxu0 0.0
        %297 = vmatprep.subr.mxu0 0.0
        %298 = vmatpush1.msra.mxu0 0.0
        %299 = vmatprep.subr.mxu0 0.0
        %300 = vmatpush1.msra.mxu0 0.0
        %301 = vmatprep.subr.mxu0 0.0
        %302 = vmatpush1.msra.mxu0 0.0
        %303 = vmatprep.subr.mxu0 0.0
        %304 = vmatpush1.msra.mxu0 0.0
        %305 = vmatprep.mubr.f32.mxu0 0.0
        %v306 = vand.u32 %v201, 4294901760
        %v307 = vsub.f32 %v201, %v306
        %v308 = vand.u32 %v307, 4294901760
        %v309 = vsub.f32 %v307, %v308
        %v310 = vand.u32 %v309, 4294901760
        %311 = vmatmul.mubr.f32.gmra.mrb[0].mxu0 %v310
        %v312 = vpop.f32.mrb[0].mxu0
        %v313 = vadd.f32 %v223, %v312
        %v314 = vpop.f32.mrb[0].mxu0
        %315 = vdwg.mxu0
        %316 = vmatprep.subr.mxu0 0.0
        %v317 = vand.u32 %v202, 4294901760
        %v318 = vsub.f32 %v202, %v317
        %v319 = vand.u32 %v318, 4294901760
        %v320 = vsub.f32 %v318, %v319
        %v321 = vand.u32 %v320, 4294901760
        %322 = vmatpush1.msra.mxu0 %v321
        %323 = vmatprep.subr.mxu0 0.0
        %v324 = vand.u32 %v203, 4294901760
        %v325 = vsub.f32 %v203, %v324
        %v326 = vand.u32 %v325, 4294901760
        %v327 = vsub.f32 %v325, %v326
        %v328 = vand.u32 %v327, 4294901760
        %329 = vmatpush1.msra.mxu0 %v328
        %330 = vmatprep.subr.mxu0 0.0
        %v331 = vand.u32 %v204, 4294901760
        %v332 = vsub.f32 %v204, %v331
        %v333 = vand.u32 %v332, 4294901760
        %v334 = vsub.f32 %v332, %v333
        %v335 = vand.u32 %v334, 4294901760
        %336 = vmatpush1.msra.mxu0 %v335
        %337 = vmatprep.subr.mxu0 0.0
        %v338 = vand.u32 %v205, 4294901760
        %v339 = vsub.f32 %v205, %v338
        %v340 = vand.u32 %v339, 4294901760
        %v341 = vsub.f32 %v339, %v340
        %v342 = vand.u32 %v341, 4294901760
        %343 = vmatpush1.msra.mxu0 %v342
        %344 = vmatprep.subr.mxu0 0.0
        %v345 = vand.u32 %v206, 4294901760
        %v346 = vsub.f32 %v206, %v345
        %v347 = vand.u32 %v346, 4294901760
        %v348 = vsub.f32 %v346, %v347
        %v349 = vand.u32 %v348, 4294901760
        %350 = vmatpush1.msra.mxu0 %v349
        %351 = vmatprep.subr.mxu0 0.0
        %v352 = vand.u32 %v207, 4294901760
        %v353 = vsub.f32 %v207, %v352
        %v354 = vand.u32 %v353, 4294901760
        %v355 = vsub.f32 %v353, %v354
        %v356 = vand.u32 %v355, 4294901760
        %357 = vmatpush1.msra.mxu0 %v356
        %358 = vmatprep.subr.mxu0 0.0
        %v359 = vand.u32 %v208, 4294901760
        %v360 = vsub.f32 %v208, %v359
        %v361 = vand.u32 %v360, 4294901760
        %v362 = vsub.f32 %v360, %v361
        %v363 = vand.u32 %v362, 4294901760
        %364 = vmatpush1.msra.mxu0 %v363
        %365 = vmatprep.subr.mxu0 0.0
        %v366 = vand.u32 %v209, 4294901760
        %v367 = vsub.f32 %v209, %v366
        %v368 = vand.u32 %v367, 4294901760
        %v369 = vsub.f32 %v367, %v368
        %v370 = vand.u32 %v369, 4294901760
        %371 = vmatpush1.msra.mxu0 %v370
        %372 = vmatprep.subr.mxu0 0.0
        %v373 = vand.u32 %v210, 4294901760
        %v374 = vsub.f32 %v210, %v373
        %v375 = vand.u32 %v374, 4294901760
        %v376 = vsub.f32 %v374, %v375
        %v377 = vand.u32 %v376, 4294901760
        %378 = vmatpush1.msra.mxu0 %v377
        %379 = vmatprep.subr.mxu0 0.0
        %v380 = vand.u32 %v211, 4294901760
        %v381 = vsub.f32 %v211, %v380
        %v382 = vand.u32 %v381, 4294901760
        %v383 = vsub.f32 %v381, %v382
        %v384 = vand.u32 %v383, 4294901760
        %385 = vmatpush1.msra.mxu0 %v384
        %386 = vmatprep.subr.mxu0 0.0
        %v387 = vand.u32 %v212, 4294901760
        %v388 = vsub.f32 %v212, %v387
        %v389 = vand.u32 %v388, 4294901760
        %v390 = vsub.f32 %v388, %v389
        %v391 = vand.u32 %v390, 4294901760
        %392 = vmatpush1.msra.mxu0 %v391
        %393 = vmatprep.subr.mxu0 0.0
        %v394 = vand.u32 %v213, 4294901760
        %v395 = vsub.f32 %v213, %v394
        %v396 = vand.u32 %v395, 4294901760
        %v397 = vsub.f32 %v395, %v396
        %v398 = vand.u32 %v397, 4294901760
        %399 = vmatpush1.msra.mxu0 %v398
        %400 = vmatprep.subr.mxu0 0.0
        %v401 = vand.u32 %v214, 4294901760
        %v402 = vsub.f32 %v214, %v401
        %v403 = vand.u32 %v402, 4294901760
        %v404 = vsub.f32 %v402, %v403
        %v405 = vand.u32 %v404, 4294901760
        %406 = vmatpush1.msra.mxu0 %v405
        %407 = vmatprep.subr.mxu0 0.0
        %v408 = vand.u32 %v215, 4294901760
        %v409 = vsub.f32 %v215, %v408
        %v410 = vand.u32 %v409, 4294901760
        %v411 = vsub.f32 %v409, %v410
        %v412 = vand.u32 %v411, 4294901760
        %413 = vmatpush1.msra.mxu0 %v412
        %414 = vmatprep.subr.mxu0 0.0
        %v415 = vand.u32 %v216, 4294901760
        %v416 = vsub.f32 %v216, %v415
        %v417 = vand.u32 %v416, 4294901760
        %v418 = vsub.f32 %v416, %v417
        %v419 = vand.u32 %v418, 4294901760
        %420 = vmatpush1.msra.mxu0 %v419
        %421 = vmatprep.subr.mxu0 0.0
        %v422 = vand.u32 %v217, 4294901760
        %v423 = vsub.f32 %v217, %v422
        %v424 = vand.u32 %v423, 4294901760
        %v425 = vsub.f32 %v423, %v424
        %v426 = vand.u32 %v425, 4294901760
        %427 = vmatpush1.msra.mxu0 %v426
        %428 = vmatprep.subr.mxu0 0.0
        %429 = vmatpush1.msra.mxu0 0.0
        %430 = vmatprep.subr.mxu0 0.0
        %431 = vmatpush1.msra.mxu0 0.0
        %432 = vmatprep.subr.mxu0 0.0
        %433 = vmatpush1.msra.mxu0 0.0
        %434 = vmatprep.subr.mxu0 0.0
        %435 = vmatpush1.msra.mxu0 0.0
        %436 = vmatprep.subr.mxu0 0.0
        %437 = vmatpush1.msra.mxu0 0.0
        %438 = vmatprep.subr.mxu0 0.0
        %439 = vmatpush1.msra.mxu0 0.0
        %440 = vmatprep.subr.mxu0 0.0
        %441 = vmatpush1.msra.mxu0 0.0
        %442 = vmatprep.subr.mxu0 0.0
        %443 = vmatpush1.msra.mxu0 0.0
        %444 = vmatprep.subr.mxu0 0.0
        %445 = vmatpush1.msra.mxu0 0.0
        %446 = vmatprep.subr.mxu0 0.0
        %447 = vmatpush1.msra.mxu0 0.0
        %448 = vmatprep.subr.mxu0 0.0
        %449 = vmatpush1.msra.mxu0 0.0
        %450 = vmatprep.subr.mxu0 0.0
        %451 = vmatpush1.msra.mxu0 0.0
        %452 = vmatprep.subr.mxu0 0.0
        %453 = vmatpush1.msra.mxu0 0.0
        %454 = vmatprep.subr.mxu0 0.0
        %455 = vmatpush1.msra.mxu0 0.0
        %456 = vmatprep.subr.mxu0 0.0
        %457 = vmatpush1.msra.mxu0 0.0
        %458 = vmatprep.subr.mxu0 0.0
        %459 = vmatpush1.msra.mxu0 0.0
        %460 = vmatprep.mubr.f32.mxu0 0.0
        %v461 = vand.u32 %v201, 4294901760
        %462 = vmatmul.mubr.f32.gmra.mrb[0].mxu0 %v461
        %v463 = vpop.f32.mrb[0].mxu0
        %v464 = vadd.f32 %v313, %v463
        %v465 = vpop.f32.mrb[0].mxu0
        %466 = vdwg.mxu0
        %467 = vmatprep.subr.mxu0 0.0
        %v468 = vand.u32 %v202, 4294901760
        %v469 = vsub.f32 %v202, %v468
        %470 = vmatpush1.msra.mxu0 %v469
        %471 = vmatprep.subr.mxu0 0.0
        %v472 = vand.u32 %v203, 4294901760
        %v473 = vsub.f32 %v203, %v472
        %474 = vmatpush1.msra.mxu0 %v473
        %475 = vmatprep.subr.mxu0 0.0
        %v476 = vand.u32 %v204, 4294901760
        %v477 = vsub.f32 %v204, %v476
        %478 = vmatpush1.msra.mxu0 %v477
        %479 = vmatprep.subr.mxu0 0.0
        %v480 = vand.u32 %v205, 4294901760
        %v481 = vsub.f32 %v205, %v480
        %482 = vmatpush1.msra.mxu0 %v481
        %483 = vmatprep.subr.mxu0 0.0
        %v484 = vand.u32 %v206, 4294901760
        %v485 = vsub.f32 %v206, %v484
        %486 = vmatpush1.msra.mxu0 %v485
        %487 = vmatprep.subr.mxu0 0.0
        %v488 = vand.u32 %v207, 4294901760
        %v489 = vsub.f32 %v207, %v488
        %490 = vmatpush1.msra.mxu0 %v489
        %491 = vmatprep.subr.mxu0 0.0
        %v492 = vand.u32 %v208, 4294901760
        %v493 = vsub.f32 %v208, %v492
        %494 = vmatpush1.msra.mxu0 %v493
        %495 = vmatprep.subr.mxu0 0.0
        %v496 = vand.u32 %v209, 4294901760
        %v497 = vsub.f32 %v209, %v496
        %498 = vmatpush1.msra.mxu0 %v497
        %499 = vmatprep.subr.mxu0 0.0
        %v500 = vand.u32 %v210, 4294901760
        %v501 = vsub.f32 %v210, %v500
        %502 = vmatpush1.msra.mxu0 %v501
        %503 = vmatprep.subr.mxu0 0.0
        %v504 = vand.u32 %v211, 4294901760
        %v505 = vsub.f32 %v211, %v504
        %506 = vmatpush1.msra.mxu0 %v505
        %507 = vmatprep.subr.mxu0 0.0
        %v508 = vand.u32 %v212, 4294901760
        %v509 = vsub.f32 %v212, %v508
        %510 = vmatpush1.msra.mxu0 %v509
        %511 = vmatprep.subr.mxu0 0.0
        %v512 = vand.u32 %v213, 4294901760
        %v513 = vsub.f32 %v213, %v512
        %514 = vmatpush1.msra.mxu0 %v513
        %515 = vmatprep.subr.mxu0 0.0
        %v516 = vand.u32 %v214, 4294901760
        %v517 = vsub.f32 %v214, %v516
        %518 = vmatpush1.msra.mxu0 %v517
        %519 = vmatprep.subr.mxu0 0.0
        %v520 = vand.u32 %v215, 4294901760
        %v521 = vsub.f32 %v215, %v520
        %522 = vmatpush1.msra.mxu0 %v521
        %523 = vmatprep.subr.mxu0 0.0
        %v524 = vand.u32 %v216, 4294901760
        %v525 = vsub.f32 %v216, %v524
        %526 = vmatpush1.msra.mxu0 %v525
        %527 = vmatprep.subr.mxu0 0.0
        %v528 = vand.u32 %v217, 4294901760
        %v529 = vsub.f32 %v217, %v528
        %530 = vmatpush1.msra.mxu0 %v529
        %531 = vmatprep.subr.mxu0 0.0
        %532 = vmatpush1.msra.mxu0 0.0
        %533 = vmatprep.subr.mxu0 0.0
        %534 = vmatpush1.msra.mxu0 0.0
        %535 = vmatprep.subr.mxu0 0.0
        %536 = vmatpush1.msra.mxu0 0.0
        %537 = vmatprep.subr.mxu0 0.0
        %538 = vmatpush1.msra.mxu0 0.0
        %539 = vmatprep.subr.mxu0 0.0
        %540 = vmatpush1.msra.mxu0 0.0
        %541 = vmatprep.subr.mxu0 0.0
        %542 = vmatpush1.msra.mxu0 0.0
        %543 = vmatprep.subr.mxu0 0.0
        %544 = vmatpush1.msra.mxu0 0.0
        %545 = vmatprep.subr.mxu0 0.0
        %546 = vmatpush1.msra.mxu0 0.0
        %547 = vmatprep.subr.mxu0 0.0
        %548 = vmatpush1.msra.mxu0 0.0
        %549 = vmatprep.subr.mxu0 0.0
        %550 = vmatpush1.msra.mxu0 0.0
        %551 = vmatprep.subr.mxu0 0.0
        %552 = vmatpush1.msra.mxu0 0.0
        %553 = vmatprep.subr.mxu0 0.0
        %554 = vmatpush1.msra.mxu0 0.0
        %555 = vmatprep.subr.mxu0 0.0
        %556 = vmatpush1.msra.mxu0 0.0
        %557 = vmatprep.subr.mxu0 0.0
        %558 = vmatpush1.msra.mxu0 0.0
        %559 = vmatprep.subr.mxu0 0.0
        %560 = vmatpush1.msra.mxu0 0.0
        %561 = vmatprep.subr.mxu0 0.0
        %562 = vmatpush1.msra.mxu0 0.0
        %563 = vmatprep.mubr.f32.mxu0 0.0
        %v564 = vand.u32 %v201, 4294901760
        %v565 = vsub.f32 %v201, %v564
        %566 = vmatmul.mubr.f32.gmra.mrb[0].mxu0 %v565
        %v567 = vpop.f32.mrb[0].mxu0
        %v568 = vadd.f32 %v464, %v567
        %v569 = vpop.f32.mrb[0].mxu0
        %570 = vdwg.mxu0
        %571 = vmatprep.subr.mxu0 0.0
        %v572 = vand.u32 %v202, 4294901760
        %573 = vmatpush1.msra.mxu0 %v572
        %574 = vmatprep.subr.mxu0 0.0
        %v575 = vand.u32 %v203, 4294901760
        %576 = vmatpush1.msra.mxu0 %v575
        %577 = vmatprep.subr.mxu0 0.0
        %v578 = vand.u32 %v204, 4294901760
        %579 = vmatpush1.msra.mxu0 %v578
        %580 = vmatprep.subr.mxu0 0.0
        %v581 = vand.u32 %v205, 4294901760
        %582 = vmatpush1.msra.mxu0 %v581
        %583 = vmatprep.subr.mxu0 0.0
        %v584 = vand.u32 %v206, 4294901760
        %585 = vmatpush1.msra.mxu0 %v584
        %586 = vmatprep.subr.mxu0 0.0
        %v587 = vand.u32 %v207, 4294901760
        %588 = vmatpush1.msra.mxu0 %v587
        %589 = vmatprep.subr.mxu0 0.0
        %v590 = vand.u32 %v208, 4294901760
        %591 = vmatpush1.msra.mxu0 %v590
        %592 = vmatprep.subr.mxu0 0.0
        %v593 = vand.u32 %v209, 4294901760
        %594 = vmatpush1.msra.mxu0 %v593
        %595 = vmatprep.subr.mxu0 0.0
        %v596 = vand.u32 %v210, 4294901760
        %597 = vmatpush1.msra.mxu0 %v596
        %598 = vmatprep.subr.mxu0 0.0
        %v599 = vand.u32 %v211, 4294901760
        %600 = vmatpush1.msra.mxu0 %v599
        %601 = vmatprep.subr.mxu0 0.0
        %v602 = vand.u32 %v212, 4294901760
        %603 = vmatpush1.msra.mxu0 %v602
        %604 = vmatprep.subr.mxu0 0.0
        %v605 = vand.u32 %v213, 4294901760
        %606 = vmatpush1.msra.mxu0 %v605
        %607 = vmatprep.subr.mxu0 0.0
        %v608 = vand.u32 %v214, 4294901760
        %609 = vmatpush1.msra.mxu0 %v608
        %610 = vmatprep.subr.mxu0 0.0
        %v611 = vand.u32 %v215, 4294901760
        %612 = vmatpush1.msra.mxu0 %v611
        %613 = vmatprep.subr.mxu0 0.0
        %v614 = vand.u32 %v216, 4294901760
        %615 = vmatpush1.msra.mxu0 %v614
        %616 = vmatprep.subr.mxu0 0.0
        %v617 = vand.u32 %v217, 4294901760
        %618 = vmatpush1.msra.mxu0 %v617
        %619 = vmatprep.subr.mxu0 0.0
        %620 = vmatpush1.msra.mxu0 0.0
        %621 = vmatprep.subr.mxu0 0.0
        %622 = vmatpush1.msra.mxu0 0.0
        %623 = vmatprep.subr.mxu0 0.0
        %624 = vmatpush1.msra.mxu0 0.0
        %625 = vmatprep.subr.mxu0 0.0
        %626 = vmatpush1.msra.mxu0 0.0
        %627 = vmatprep.subr.mxu0 0.0
        %628 = vmatpush1.msra.mxu0 0.0
        %629 = vmatprep.subr.mxu0 0.0
        %630 = vmatpush1.msra.mxu0 0.0
        %631 = vmatprep.subr.mxu0 0.0
        %632 = vmatpush1.msra.mxu0 0.0
        %633 = vmatprep.subr.mxu0 0.0
        %634 = vmatpush1.msra.mxu0 0.0
        %635 = vmatprep.subr.mxu0 0.0
        %636 = vmatpush1.msra.mxu0 0.0
        %637 = vmatprep.subr.mxu0 0.0
        %638 = vmatpush1.msra.mxu0 0.0
        %639 = vmatprep.subr.mxu0 0.0
        %640 = vmatpush1.msra.mxu0 0.0
        %641 = vmatprep.subr.mxu0 0.0
        %642 = vmatpush1.msra.mxu0 0.0
        %643 = vmatprep.subr.mxu0 0.0
        %644 = vmatpush1.msra.mxu0 0.0
        %645 = vmatprep.subr.mxu0 0.0
        %646 = vmatpush1.msra.mxu0 0.0
        %647 = vmatprep.subr.mxu0 0.0
        %648 = vmatpush1.msra.mxu0 0.0
        %649 = vmatprep.subr.mxu0 0.0
        %650 = vmatpush1.msra.mxu0 0.0
        %651 = vmatprep.mubr.f32.mxu0 0.0
        %v652 = vand.u32 %v201, 4294901760
        %v653 = vsub.f32 %v201, %v652
        %v654 = vand.u32 %v653, 4294901760
        %655 = vmatmul.mubr.f32.gmra.mrb[0].mxu0 %v654
        %v656 = vpop.f32.mrb[0].mxu0
        %v657 = vadd.f32 %v568, %v656
        %v658 = vpop.f32.mrb[0].mxu0
        %659 = vdwg.mxu0
        %660 = vmatprep.subr.mxu0 0.0
        %v661 = vand.u32 %v202, 4294901760
        %v662 = vsub.f32 %v202, %v661
        %v663 = vand.u32 %v662, 4294901760
        %664 = vmatpush1.msra.mxu0 %v663
        %665 = vmatprep.subr.mxu0 0.0
        %v666 = vand.u32 %v203, 4294901760
        %v667 = vsub.f32 %v203, %v666
        %v668 = vand.u32 %v667, 4294901760
        %669 = vmatpush1.msra.mxu0 %v668
        %670 = vmatprep.subr.mxu0 0.0
        %v671 = vand.u32 %v204, 4294901760
        %v672 = vsub.f32 %v204, %v671
        %v673 = vand.u32 %v672, 4294901760
        %674 = vmatpush1.msra.mxu0 %v673
        %675 = vmatprep.subr.mxu0 0.0
        %v676 = vand.u32 %v205, 4294901760
        %v677 = vsub.f32 %v205, %v676
        %v678 = vand.u32 %v677, 4294901760
        %679 = vmatpush1.msra.mxu0 %v678
        %680 = vmatprep.subr.mxu0 0.0
        %v681 = vand.u32 %v206, 4294901760
        %v682 = vsub.f32 %v206, %v681
        %v683 = vand.u32 %v682, 4294901760
        %684 = vmatpush1.msra.mxu0 %v683
        %685 = vmatprep.subr.mxu0 0.0
        %v686 = vand.u32 %v207, 4294901760
        %v687 = vsub.f32 %v207, %v686
        %v688 = vand.u32 %v687, 4294901760
        %689 = vmatpush1.msra.mxu0 %v688
        %690 = vmatprep.subr.mxu0 0.0
        %v691 = vand.u32 %v208, 4294901760
        %v692 = vsub.f32 %v208, %v691
        %v693 = vand.u32 %v692, 4294901760
        %694 = vmatpush1.msra.mxu0 %v693
        %695 = vmatprep.subr.mxu0 0.0
        %v696 = vand.u32 %v209, 4294901760
        %v697 = vsub.f32 %v209, %v696
        %v698 = vand.u32 %v697, 4294901760
        %699 = vmatpush1.msra.mxu0 %v698
        %700 = vmatprep.subr.mxu0 0.0
        %v701 = vand.u32 %v210, 4294901760
        %v702 = vsub.f32 %v210, %v701
        %v703 = vand.u32 %v702, 4294901760
        %704 = vmatpush1.msra.mxu0 %v703
        %705 = vmatprep.subr.mxu0 0.0
        %v706 = vand.u32 %v211, 4294901760
        %v707 = vsub.f32 %v211, %v706
        %v708 = vand.u32 %v707, 4294901760
        %709 = vmatpush1.msra.mxu0 %v708
        %710 = vmatprep.subr.mxu0 0.0
        %v711 = vand.u32 %v212, 4294901760
        %v712 = vsub.f32 %v212, %v711
        %v713 = vand.u32 %v712, 4294901760
        %714 = vmatpush1.msra.mxu0 %v713
        %715 = vmatprep.subr.mxu0 0.0
        %v716 = vand.u32 %v213, 4294901760
        %v717 = vsub.f32 %v213, %v716
        %v718 = vand.u32 %v717, 4294901760
        %719 = vmatpush1.msra.mxu0 %v718
        %720 = vmatprep.subr.mxu0 0.0
        %v721 = vand.u32 %v214, 4294901760
        %v722 = vsub.f32 %v214, %v721
        %v723 = vand.u32 %v722, 4294901760
        %724 = vmatpush1.msra.mxu0 %v723
        %725 = vmatprep.subr.mxu0 0.0
        %v726 = vand.u32 %v215, 4294901760
        %v727 = vsub.f32 %v215, %v726
        %v728 = vand.u32 %v727, 4294901760
        %729 = vmatpush1.msra.mxu0 %v728
        %730 = vmatprep.subr.mxu0 0.0
        %v731 = vand.u32 %v216, 4294901760
        %v732 = vsub.f32 %v216, %v731
        %v733 = vand.u32 %v732, 4294901760
        %734 = vmatpush1.msra.mxu0 %v733
        %735 = vmatprep.subr.mxu0 0.0
        %v736 = vand.u32 %v217, 4294901760
        %v737 = vsub.f32 %v217, %v736
        %v738 = vand.u32 %v737, 4294901760
        %739 = vmatpush1.msra.mxu0 %v738
        %740 = vmatprep.subr.mxu0 0.0
        %741 = vmatpush1.msra.mxu0 0.0
        %742 = vmatprep.subr.mxu0 0.0
        %743 = vmatpush1.msra.mxu0 0.0
        %744 = vmatprep.subr.mxu0 0.0
        %745 = vmatpush1.msra.mxu0 0.0
        %746 = vmatprep.subr.mxu0 0.0
        %747 = vmatpush1.msra.mxu0 0.0
        %748 = vmatprep.subr.mxu0 0.0
        %749 = vmatpush1.msra.mxu0 0.0
        %750 = vmatprep.subr.mxu0 0.0
        %751 = vmatpush1.msra.mxu0 0.0
        %752 = vmatprep.subr.mxu0 0.0
        %753 = vmatpush1.msra.mxu0 0.0
        %754 = vmatprep.subr.mxu0 0.0
        %755 = vmatpush1.msra.mxu0 0.0
        %756 = vmatprep.subr.mxu0 0.0
        %757 = vmatpush1.msra.mxu0 0.0
        %758 = vmatprep.subr.mxu0 0.0
        %759 = vmatpush1.msra.mxu0 0.0
        %760 = vmatprep.subr.mxu0 0.0
        %761 = vmatpush1.msra.mxu0 0.0
        %762 = vmatprep.subr.mxu0 0.0
        %763 = vmatpush1.msra.mxu0 0.0
        %764 = vmatprep.subr.mxu0 0.0
        %765 = vmatpush1.msra.mxu0 0.0
        %766 = vmatprep.subr.mxu0 0.0
        %767 = vmatpush1.msra.mxu0 0.0
        %768 = vmatprep.subr.mxu0 0.0
        %769 = vmatpush1.msra.mxu0 0.0
        %770 = vmatprep.subr.mxu0 0.0
        %771 = vmatpush1.msra.mxu0 0.0
        %772 = vmatprep.mubr.f32.mxu0 0.0
        %v773 = vand.u32 %v201, 4294901760
        %774 = vmatmul.mubr.f32.gmra.mrb[0].mxu0 %v773
        %v775 = vpop.f32.mrb[0].mxu0
        %v776 = vadd.f32 %v657, %v775
        %v777 = vpop.f32.mrb[0].mxu0
        %778 = vdwg.mxu0
        %779 = vmatprep.subr.mxu0 0.0
        %v780 = vand.u32 %v202, 4294901760
        %781 = vmatpush1.msra.mxu0 %v780
        %782 = vmatprep.subr.mxu0 0.0
        %v783 = vand.u32 %v203, 4294901760
        %784 = vmatpush1.msra.mxu0 %v783
        %785 = vmatprep.subr.mxu0 0.0
        %v786 = vand.u32 %v204, 4294901760
        %787 = vmatpush1.msra.mxu0 %v786
        %788 = vmatprep.subr.mxu0 0.0
        %v789 = vand.u32 %v205, 4294901760
        %790 = vmatpush1.msra.mxu0 %v789
        %791 = vmatprep.subr.mxu0 0.0
        %v792 = vand.u32 %v206, 4294901760
        %793 = vmatpush1.msra.mxu0 %v792
        %794 = vmatprep.subr.mxu0 0.0
        %v795 = vand.u32 %v207, 4294901760
        %796 = vmatpush1.msra.mxu0 %v795
        %797 = vmatprep.subr.mxu0 0.0
        %v798 = vand.u32 %v208, 4294901760
        %799 = vmatpush1.msra.mxu0 %v798
        %800 = vmatprep.subr.mxu0 0.0
        %v801 = vand.u32 %v209, 4294901760
        %802 = vmatpush1.msra.mxu0 %v801
        %803 = vmatprep.subr.mxu0 0.0
        %v804 = vand.u32 %v210, 4294901760
        %805 = vmatpush1.msra.mxu0 %v804
        %806 = vmatprep.subr.mxu0 0.0
        %v807 = vand.u32 %v211, 4294901760
        %808 = vmatpush1.msra.mxu0 %v807
        %809 = vmatprep.subr.mxu0 0.0
        %v810 = vand.u32 %v212, 4294901760
        %811 = vmatpush1.msra.mxu0 %v810
        %812 = vmatprep.subr.mxu0 0.0
        %v813 = vand.u32 %v213, 4294901760
        %814 = vmatpush1.msra.mxu0 %v813
        %815 = vmatprep.subr.mxu0 0.0
        %v816 = vand.u32 %v214, 4294901760
        %817 = vmatpush1.msra.mxu0 %v816
        %818 = vmatprep.subr.mxu0 0.0
        %v819 = vand.u32 %v215, 4294901760
        %820 = vmatpush1.msra.mxu0 %v819
        %821 = vmatprep.subr.mxu0 0.0
        %v822 = vand.u32 %v216, 4294901760
        %823 = vmatpush1.msra.mxu0 %v822
        %824 = vmatprep.subr.mxu0 0.0
        %v825 = vand.u32 %v217, 4294901760
        %826 = vmatpush1.msra.mxu0 %v825
        %827 = vmatprep.subr.mxu0 0.0
        %828 = vmatpush1.msra.mxu0 0.0
        %829 = vmatprep.subr.mxu0 0.0
        %830 = vmatpush1.msra.mxu0 0.0
        %831 = vmatprep.subr.mxu0 0.0
        %832 = vmatpush1.msra.mxu0 0.0
        %833 = vmatprep.subr.mxu0 0.0
        %834 = vmatpush1.msra.mxu0 0.0
        %835 = vmatprep.subr.mxu0 0.0
        %836 = vmatpush1.msra.mxu0 0.0
        %837 = vmatprep.subr.mxu0 0.0
        %838 = vmatpush1.msra.mxu0 0.0
        %839 = vmatprep.subr.mxu0 0.0
        %840 = vmatpush1.msra.mxu0 0.0
        %841 = vmatprep.subr.mxu0 0.0
        %842 = vmatpush1.msra.mxu0 0.0
        %843 = vmatprep.subr.mxu0 0.0
        %844 = vmatpush1.msra.mxu0 0.0
        %845 = vmatprep.subr.mxu0 0.0
        %846 = vmatpush1.msra.mxu0 0.0
        %847 = vmatprep.subr.mxu0 0.0
        %848 = vmatpush1.msra.mxu0 0.0
        %849 = vmatprep.subr.mxu0 0.0
        %850 = vmatpush1.msra.mxu0 0.0
        %851 = vmatprep.subr.mxu0 0.0
        %852 = vmatpush1.msra.mxu0 0.0
        %853 = vmatprep.subr.mxu0 0.0
        %854 = vmatpush1.msra.mxu0 0.0
        %855 = vmatprep.subr.mxu0 0.0
        %856 = vmatpush1.msra.mxu0 0.0
        %857 = vmatprep.subr.mxu0 0.0
        %858 = vmatpush1.msra.mxu0 0.0
        %859 = vmatprep.mubr.f32.mxu0 0.0
        %v860 = vand.u32 %v201, 4294901760
        %861 = vmatmul.mubr.f32.gmra.mrb[0].mxu0 %v860
        %v862 = vpop.f32.mrb[0].mxu0
        %v863 = vadd.f32 %v776, %v862
        %v864 = vpop.f32.mrb[0].mxu0
        %865 = vdwg.mxu0
        %v866 = vadd.f32 %v201, %v863
        %867 = vst [vmem:[%s200] sm:$0xff] %v866
        %s868 = sand.u32 %s97, 1
        %s869 = scalar_lea.sflag [#allocation4], %s868
        %s870 = sand.u32 %s97, 1
        %s871 = smul.addr %s870, 8
        %s872 = scalar_lea.vmem [#allocation7], %s871
        // Predicated region
        $region41: #{residual_add.1} parent=31 // pred_check
          %p873 = pneg %p107
        $region42: #{residual_add.1} parent=31 // pred_check_branch
          %875 = sbr.rel (%p873) target = $region44
        $region43: #{residual_add.1} parent=31 // pred_region
          %s877 = ssub.s32 128, 128
          %878 = vsyncadd %s869, %s877
          %s879 = smul.addr %s21, 128
          %s880 = scalar_lea.hbm %s3, %s879
          %s882 = sshll.u32 %s872, 4
          %s883 = int_to_ptr.vmem [resolvable:$true] %s882
          %885 = dma.vmem_to_hbm [thread:$0]  %s883, 128, %s880, %s869
        $region44: #{residual_add.1} parent=31 // pred_fallthru
          _
      $region32: #{residual_add.1} parent=5 // pred_fallthru
        _
      %p886 = scmp.le.s32.totalorder 2, %s16
      // Predicated region
      $region45: #{residual_add.1} parent=5 // pred_check
        %p887 = pneg %p886
      $region46: #{residual_add.1} parent=5 // pred_check_branch
        %889 = sbr.rel (%p887) target = $region48
      $region47: #{residual_add.1} parent=5 // pred_region
        %s890 = ssub.s32 %s16, 2
        // Predicated region
        $region49: #{residual_add.1} parent=47 // pred_check
          %p891 = pneg %p113
        $region50: #{residual_add.1} parent=47 // pred_check_branch
          %893 = sbr.rel (%p891) target = $region52
        $region51: #{residual_add.1} parent=47 // pred_region
          %s894 = sand.u32 %s98, 1
          %s895 = scalar_lea.sflag [#allocation4], %s894
          %s896 = sand.u32 %s98, 1
          %s897 = smul.addr %s896, 8
          %s898 = scalar_lea.vmem [#allocation7], %s897
          %899 = dma.done %s895, 128
        $region52: #{residual_add.1} parent=47 // pred_fallthru
          _
      $region48: #{residual_add.1} parent=5 // pred_fallthru
        _
    $region6: #{residual_add.1} parent=1 // loop_footer
      %s20 = sadd.s32 1, %s16
    $region7: #{residual_add.1} parent=1 // loop_footer_branch
      %15 = sbr.rel target = $region3
    $region8: #{residual_add.1} parent=1 // loop_exit
      _
    %900 = vsyncpa [#allocation3], 1
    %s901 = scalar_lea.sflag [#allocation3], 1
    %902 = vsyncpa %s901, 1
    %903 = vsyncpa [#allocation6], 1
    %904 = vsyncpa [#allocation4], 1
    %s905 = scalar_lea.sflag [#allocation4], 1
    %906 = vsyncpa %s905, 1

</llo_original>
